<compile_context>
chip_gen: v7x
topology: tpu7x:2x2x1
jax: 0.10.0
libtpu: 0.0.40
codegen_flags: <defaults>
</compile_context>

<pallas_src>
import jax
import jax.numpy as jnp
from jax.experimental import pallas as pl
from jax.experimental.pallas import tpu as pltpu


def combine_kernel(x_ref, wt_ref, b_ref, o_ref):
    """Fused multi-branch 1x1 conv (channels-first).

    x_ref : (C, TS)     spatial tile of one batch element, channels on sublanes
    wt_ref: (TCO, C)    tile of the pre-concatenated branch weights
    b_ref : (TCO, 1)    tile of the pre-concatenated biases, f32
    o_ref : (TCO, TS)   output tile (already NCHW-ordered)
    """
    y = jnp.dot(wt_ref[...], x_ref[...], preferred_element_type=jnp.float32)
    o_ref[...] = (y + b_ref[...]).astype(o_ref.dtype)


def _cdiv(a, b):
    return -(-a // b)


def _round_up(v, m):
    return _cdiv(v, m) * m


def _round_down(v, m):
    return (v // m) * m


# Conservative per-call VMEM budget for the pipelined blocks + resident weights;
# vmem_limit_bytes is raised to match (with headroom) on all generations.
_VMEM_BUDGET_BYTES = 24 * 1024 * 1024
_VMEM_LIMIT_BYTES = 32 * 1024 * 1024
_MIN_GRID_STEPS = 4  # >= 2 grid steps per TensorCore on v7x megacore


def _block_spec(shape, index_map, *, single_buffer=False):
    """BlockSpec helper; single-buffers grid-invariant operands when supported."""
    if single_buffer:
        try:
            return pl.BlockSpec(shape, index_map, pipeline_mode=pl.Buffered(1))
        except (TypeError, AttributeError):
            pass  # older jax without pipeline_mode -> default double buffering
    return pl.BlockSpec(shape, index_map)


def combine_conv1x1_forward(x_nchw, branch_params, *, tile_target=1024,
                            co_tile=None,
                            vmem_budget_bytes=_VMEM_BUDGET_BYTES):
    """Equivalent of Combine(conv1x1_0, conv1x1_1, ...)(x).

    x_nchw        : (N, C, H, W)
    branch_params : list of (weight, bias) per branch; weight may be PyTorch
                    Conv2d-shaped (C_out, C_in, 1, 1) or (C_out, C_in),
                    bias is (C_out,).
    returns       : (N, sum(C_out_i), H, W), channel-concatenated in branch order.
    """
    N, C, H, W = x_nchw.shape
    x_dtype = x_nchw.dtype

    # --- pre-concatenate branch weights / biases along the out-channel axis ---
    ws, bs = [], []
    for w, b in branch_params:
        w = jnp.asarray(w)
        if w.ndim == 4:                      # PyTorch (C_out, C_in, 1, 1)
            w = w.reshape(w.shape[0], w.shape[1])
        assert w.shape[1] == C
        ws.append(w)
        bs.append(jnp.asarray(b).reshape(-1))
    wt = jnp.concatenate(ws, axis=0).astype(x_dtype)                       # (Cout, C)
    bias = jnp.concatenate(bs, axis=0).reshape(-1, 1).astype(jnp.float32)  # (Cout, 1)
    Cout = wt.shape[0]

    # --- channels-first flatten of the spatial dims (free reshape, NO pad) ---
    S = H * W
    x_flat = x_nchw.reshape(N, C, S)

    x_bytes = jnp.dtype(x_dtype).itemsize
    w_bytes = jnp.dtype(wt.dtype).itemsize
    o_bytes = x_bytes
    # Sublane-packing quantum for the out-channel (second-to-last) block dim.
    sub_q = 8 * max(1, 4 // o_bytes)

    # --- out-channel tile: keep the resident weight block within the budget ---
    if co_tile is not None:
        tco = min(int(co_tile), Cout)
    else:
        w_budget = max(1, vmem_budget_bytes // 3)
        if Cout * C * w_bytes <= w_budget:
            tco = Cout
        else:
            tco = w_budget // max(1, C * w_bytes)
    if tco < Cout:
        tco = max(sub_q, _round_down(tco, sub_q))   # multiple of sublane quantum
        tco = min(tco, Cout)                        # Cout < sub_q -> single full tile
    n_co = _cdiv(Cout, tco)

    # Weight/bias VMEM: single-buffered when grid-invariant, else double-buffered.
    wb_factor = 1 if n_co == 1 else 2
    wb_vmem = wb_factor * tco * (C * w_bytes + 4)

    # --- spatial tile: 128-aligned, capped by tile_target, S and the VMEM budget ---
    per_col = 2 * (C * x_bytes + tco * o_bytes)     # double-buffered x + out blocks
    ts_cap = max(128, _round_down(max(0, vmem_budget_bytes - wb_vmem) // per_col, 128))
    ts = min(int(tile_target), _round_up(S, 128), ts_cap)
    ts = max(128, _round_down(ts, 128))

    # Keep enough parallel grid steps to feed both TensorCores on v7x.
    while ts > 128 and N * n_co * _cdiv(S, ts) < _MIN_GRID_STEPS:
        ts = max(128, _round_down(ts // 2, 128))

    n_s = _cdiv(S, ts)
    grid = (N, n_co, n_s)
    const_wb = n_co == 1   # weights/bias never change across the grid

    out_flat = pl.pallas_call(
        combine_kernel,
        out_shape=jax.ShapeDtypeStruct((N, Cout, S), x_dtype),
        grid_spec=pltpu.PrefetchScalarGridSpec(
            num_scalar_prefetch=0,
            grid=grid,
            in_specs=[
                # x tile: batch dim squeezed, channels x spatial tile
                _block_spec((None, C, ts), lambda n, co, s: (n, 0, s)),
                # fused weights / bias (resident across the spatial axis)
                _block_spec((tco, C), lambda n, co, s: (co, 0),
                            single_buffer=const_wb),
                _block_spec((tco, 1), lambda n, co, s: (co, 0),
                            single_buffer=const_wb),
            ],
            out_specs=pl.BlockSpec((None, tco, ts), lambda n, co, s: (n, co, s)),
        ),
        compiler_params=pltpu.CompilerParams(
            dimension_semantics=("parallel", "parallel", "parallel"),
            vmem_limit_bytes=_VMEM_LIMIT_BYTES),
    )(x_flat, wt, bias)

    return out_flat.reshape(N, Cout, H, W)


def _init_conv_params(key, c_in, c_out):
    """Deterministic init mimicking nn.Conv2d(c_in, c_out, 1) (PyTorch shapes)."""
    kw, kb = jax.random.split(key)
    bound = 1.0 / (c_in ** 0.5)  # 1x1 kernel -> fan_in = c_in
    w = jax.random.uniform(kw, (c_out, c_in, 1, 1), jnp.float32, -bound, bound)
    b = jax.random.uniform(kb, (c_out,), jnp.float32, -bound, bound)
    return w, b


def _reference(x, branch_params):
    """Pure-JAX reference of Combine(conv1x1_0, conv1x1_1, ...)(x)."""
    outs = []
    for w, b in branch_params:
        w2d = jnp.asarray(w).reshape(w.shape[0], w.shape[1])
        y = jnp.einsum("nchw,oc->nohw", x, w2d) + jnp.asarray(b)[None, :, None, None]
        outs.append(y)
    return jnp.concatenate(outs, axis=1)


if __name__ == "__main__":
    key = jax.random.PRNGKey(0)
    k_x, k_m1, k_m2, k_x2, k_m3, k_m4, k_x3 = jax.random.split(key, 7)

    # --- main test: Combine(Conv2d(4,8,1), Conv2d(4,16,1)) on (2,4,16,16) ---
    N, C, H, W = 2, 4, 16, 16
    C1, C2 = 8, 16
    x = jax.random.normal(k_x, (N, C, H, W), jnp.float32)
    params = [_init_conv_params(k_m1, C, C1), _init_conv_params(k_m2, C, C2)]

    out = jax.block_until_ready(combine_conv1x1_forward(x, params))
    ref = _reference(x, params)
    assert out.shape == (N, C1 + C2, H, W)
    assert jnp.allclose(out, ref, atol=1e-5, rtol=1e-5)

    # --- ragged spatial size (H*W not a multiple of 128): Pallas masks the
    #     last spatial tile; no wrapper-side pad / slice any more ---
    Hr, Wr = 5, 13
    x_r = jax.random.normal(k_x2, (N, C, Hr, Wr), jnp.float32)
    out_r = jax.block_until_ready(combine_conv1x1_forward(x_r, params))
    ref_r = _reference(x_r, params)
    assert out_r.shape == (N, C1 + C2, Hr, Wr)
    assert jnp.allclose(out_r, ref_r, atol=1e-5, rtol=1e-5)

    # --- out-channel tiling path (explicit small co_tile, ragged last Cout tile) ---
    Cc, C3, C4 = 8, 16, 24
    x_c = jax.random.normal(k_x3, (N, Cc, H, W), jnp.float32)
    params_c = [_init_conv_params(k_m3, Cc, C3), _init_conv_params(k_m4, Cc, C4)]
    out_c = jax.block_until_ready(
        combine_conv1x1_forward(x_c, params_c, co_tile=16))
    ref_c = _reference(x_c, params_c)
    assert out_c.shape == (N, C3 + C4, H, W)
    assert jnp.allclose(out_c, ref_c, atol=1e-4, rtol=1e-4)

    # --- bf16 end-to-end (f32 accumulation inside the kernel) ---
    x_bf = x.astype(jnp.bfloat16)
    out_bf = jax.block_until_ready(combine_conv1x1_forward(x_bf, params))
    ref_bf = _reference(x_bf.astype(jnp.float32), params)
    assert out_bf.dtype == jnp.bfloat16
    assert jnp.max(jnp.abs(out_bf.astype(jnp.float32) - ref_bf)) < 1e-1

    print("KERNEL_OK")
</pallas_src>

<mosaic_0001>
module attributes {stable_mosaic.version = 11 : i64} {
  func.func @combine_kernel(%arg0: i32, %arg1: i32, %arg2: i32, %arg3: memref<1x4x128xf32, #tpu.memory_space<vmem>>, %arg4: memref<24x4xf32, #tpu.memory_space<vmem>>, %arg5: memref<24x1xf32, #tpu.memory_space<vmem>>, %arg6: memref<1x24x128xf32, #tpu.memory_space<vmem>>) attributes {dimension_semantics = [#tpu.dimension_semantics<parallel>, #tpu.dimension_semantics<parallel>, #tpu.dimension_semantics<parallel>], iteration_bounds = array<i64: 2, 1, 2>, scalar_prefetch = 0 : i64, scratch_operands = 0 : i64, tpu.core_type = #tpu.core_type<tc>, window_params = [{transform_indices = @transform_0, window_bounds = array<i64: 1, 4, 128>}, {pipeline_mode = #tpu.pipeline_mode<synchronous>, transform_indices = @transform_1, window_bounds = array<i64: 24, 4>}, {pipeline_mode = #tpu.pipeline_mode<synchronous>, transform_indices = @transform_2, window_bounds = array<i64: 24, 1>}, {transform_indices = @transform_3, window_bounds = array<i64: 1, 24, 128>}]} {
    %c0 = arith.constant 0 : index
    %c0_0 = arith.constant 0 : index
    %0 = vector.load %arg4[%c0, %c0_0] : memref<24x4xf32, #tpu.memory_space<vmem>>, vector<24x4xf32>
    %c0_1 = arith.constant 0 : index
    %c0_2 = arith.constant 0 : index
    %c0_3 = arith.constant 0 : index
    %1 = vector.load %arg3[%c0_1, %c0_2, %c0_3] : memref<1x4x128xf32, #tpu.memory_space<vmem>>, vector<1x4x128xf32>
    %2 = vector.shape_cast %1 : vector<1x4x128xf32> to vector<4x128xf32>
    %cst = arith.constant dense<0.000000e+00> : vector<24x128xf32>
    %3 = tpu.matmul %0, %2, %cst {dimension_numbers = #tpu.dot_dimension_numbers<[1], [0], [0], [1], [0, 0, 1, 1], [], []>} : vector<24x4xf32>, vector<4x128xf32>, vector<24x128xf32> -> vector<24x128xf32>
    %c0_4 = arith.constant 0 : index
    %c0_5 = arith.constant 0 : index
    %4 = vector.load %arg5[%c0_4, %c0_5] : memref<24x1xf32, #tpu.memory_space<vmem>>, vector<24x1xf32>
    %5 = vector.broadcast %4 : vector<24x1xf32> to vector<24x128xf32>
    %6 = arith.addf %3, %5 : vector<24x128xf32>
    %c0_6 = arith.constant 0 : index
    %c0_7 = arith.constant 0 : index
    %c0_8 = arith.constant 0 : index
    %7 = vector.load %arg6[%c0_6, %c0_7, %c0_8] : memref<1x24x128xf32, #tpu.memory_space<vmem>>, vector<1x24x128xf32>
    %8 = vector.shape_cast %7 : vector<1x24x128xf32> to vector<24x128xf32>
    %9 = vector.shape_cast %6 : vector<24x128xf32> to vector<1x24x128xf32>
    tpu.vector_store %arg6[%c0_6, %c0_7, %c0_8], %9 {strides = array<i32>} : memref<1x24x128xf32, #tpu.memory_space<vmem>>, vector<1x24x128xf32>,
    return
  }
  func.func @transform_0(%arg0: i32, %arg1: i32, %arg2: i32) -> (i32, i32, i32) {
    %c0_i32 = arith.constant 0 : i32
    %c0_i32_0 = arith.constant 0 : i32
    return %arg0, %c0_i32, %arg2 : i32, i32, i32
  }
  func.func @transform_1(%arg0: i32, %arg1: i32, %arg2: i32) -> (i32, i32) {
    %c0_i32 = arith.constant 0 : i32
    %c0_i32_0 = arith.constant 0 : i32
    return %arg1, %c0_i32 : i32, i32
  }
  func.func @transform_2(%arg0: i32, %arg1: i32, %arg2: i32) -> (i32, i32) {
    %c0_i32 = arith.constant 0 : i32
    %c0_i32_0 = arith.constant 0 : i32
    return %arg1, %c0_i32 : i32, i32
  }
  func.func @transform_3(%arg0: i32, %arg1: i32, %arg2: i32) -> (i32, i32, i32) {
    %c0_i32 = arith.constant 0 : i32
    return %arg0, %arg1, %arg2 : i32, i32, i32
  }
}

</mosaic_0001>

<llo_original>
// kernel: tpu_custom_call.1
$region0: #{tpu_custom_call.1}
  #allocation0 [shape = 'u32[]', space=smem, size = 0x4, offset = 0x4, fixed_abs, tag = 'smem constant byte address 0x4 - core index']
  #allocation1 [shape = 'u32[144,128]{1,0:T(1,128)}', space=vmem, size = 0x12000, scoped, tag = 'internal scratch']
  %s0 = inlined_call_operand.vmem [shape: f32[2,4,256], index: 0, kind: input, shape index: {}]
  %s1 = inlined_call_operand.vmem [shape: f32[24,4], index: 1, kind: input, shape index: {}]
  %s2 = inlined_call_operand.vmem [shape: f32[24,1], index: 2, kind: input, shape index: {}]
  %s3 = inlined_call_operand.hbm [shape: f32[2,24,256], index: 3, kind: output, shape index: {}]
  %s4 = sld [smem:[#allocation0]]
  $region45: #{tpu_custom_call.1} parent=0
    _
  %s6 = ssub.s32 1, %s4
  %s7 = scalar_select 0, %s6, %s4
  $region1: #{tpu_custom_call.1} parent=0
    #allocation2 [shape = 'u8[24576]{0}', space=vmem, size = 0x6000, scoped, tag = 'output window, operand 0']
    #allocation3 [shape = 's32[2]{0}', space=sflag, size = 0x8, scoped, tag = 'scoped memory for tpu_custom_call.1']
    %8 = vsyncpa [#allocation3], 0
    %s9 = scalar_lea.sflag [#allocation3], 1
    %10 = vsyncpa %s9, 0
    loop: start=0, step=1, limit=6
    $region2: #{tpu_custom_call.1} parent=1 // loop_pre_header
      _
    $region3: #{tpu_custom_call.1} parent=1 // loop_header
      %s12 = sphi 0, %s16
      %p13 = scmp.ge.s32.totalorder %s12, 6
      %s19 = sphi 0, %s38
      %s20 = sphi 0, %s34
      %s21 = sphi 0, %s30
      %s22 = sphi 0, %s19
      %s23 = sphi 0, %s20
      %s24 = sphi 0, %s21
      %s25 = sphi 0, %s22
      %s26 = sphi 0, %s23
      %s27 = sphi 0, %s24
      %s43 = sphi 0, %s45
      %s46 = sphi 0, %s43
      %s47 = sphi 0, %s46
      %s63 = sphi 0, %s47
      %s69 = sphi 0, %s71
      %s72 = sphi 0, %s69
      %s73 = sphi 0, %s72
      %s89 = sphi 0, %s73
      %s95 = sphi 0, %s97
      %s98 = sphi 0, %s95
      %s99 = sphi 0, %s98
      %s115 = sphi 0, %s99
      %s125 = sphi 0, %s127
      %s128 = sphi 0, %s125
      %s129 = sphi 0, %s128
      %s145 = sphi 0, %s129
    $region4: #{tpu_custom_call.1} parent=1 // loop_header_branch
      %15 = sbr.rel (%p13) target = $region8
    $region5: #{tpu_custom_call.1} parent=1 // loop_body
      %s17 = ssub.s32 %s12, 1
      %s18 = ssub.s32 %s12, 2
      %s28 = sadd.s32 1, %s21
      %p29 = scmp.ge.s32.totalorder %s28, 2
      %s30 = scalar_select %p29, 0, %s28
      %s31 = sadd.s32 1, %s20
      %s32 = scalar_select %p29, %s31, %s20
      %p33 = scmp.ge.s32.totalorder %s32, 1
      %s34 = scalar_select %p33, 0, %s32
      %s35 = sadd.s32 1, %s19
      %s36 = scalar_select %p33, %s35, %s19
      %p37 = scmp.ge.s32.totalorder %s36, 2
      %s38 = scalar_select %p37, 0, %s36
      %s39 = ssub.s32 %s19, %s38
      %s40 = ssub.s32 %s21, %s30
      %s41 = sor.u32 %s39, %s40
      %p42 = scmp.eq.s32.totalorder %s41, 0
      %s44 = sadd.s32 %s43, 1
      %s45 = scalar_select %p42, %s43, %s44
      %p48 = pneg %p42
      %p49 = scmp.eq.s32.totalorder %s12, 3
      %p50 = por %p48, %p49
      %p51 = scmp.ne.s32.totalorder %s43, %s46
      %p52 = scmp.eq.s32.totalorder %s12, 0
      %p53 = por %p51, %p52
      %p54 = scmp.ne.s32.totalorder %s43, %s46
      %p55 = scmp.eq.s32.totalorder %s17, 3
      %p56 = por %p54, %p55
      %p57 = scmp.ne.s32.totalorder %s46, %s47
      %p58 = scmp.eq.s32.totalorder %s17, 0
      %p59 = por %p57, %p58
      %p60 = scmp.ne.s32.totalorder %s46, %s47
      %p61 = scmp.eq.s32.totalorder %s18, 3
      %p62 = por %p60, %p61
      %p64 = scmp.ne.s32.totalorder %s47, %s63
      %p65 = scmp.eq.s32.totalorder %s18, 0
      %p66 = por %p64, %p65
      %s67 = ssub.s32 %s20, %s34
      %p68 = scmp.eq.s32.totalorder %s67, 0
      %s70 = sadd.s32 %s69, 1
      %s71 = scalar_select %p68, %s69, %s70
      %p74 = pneg %p68
      %p75 = scmp.eq.s32.totalorder %s12, 3
      %p76 = por %p74, %p75
      %p77 = scmp.ne.s32.totalorder %s69, %s72
      %p78 = scmp.eq.s32.totalorder %s12, 0
      %p79 = por %p77, %p78
      %p80 = scmp.ne.s32.totalorder %s69, %s72
      %p81 = scmp.eq.s32.totalorder %s17, 3
      %p82 = por %p80, %p81
      %p83 = scmp.ne.s32.totalorder %s72, %s73
      %p84 = scmp.eq.s32.totalorder %s17, 0
      %p85 = por %p83, %p84
      %p86 = scmp.ne.s32.totalorder %s72, %s73
      %p87 = scmp.eq.s32.totalorder %s18, 3
      %p88 = por %p86, %p87
      %p90 = scmp.ne.s32.totalorder %s73, %s89
      %p91 = scmp.eq.s32.totalorder %s18, 0
      %p92 = por %p90, %p91
      %s93 = ssub.s32 %s20, %s34
      %p94 = scmp.eq.s32.totalorder %s93, 0
      %s96 = sadd.s32 %s95, 1
      %s97 = scalar_select %p94, %s95, %s96
      %p100 = pneg %p94
      %p101 = scmp.eq.s32.totalorder %s12, 3
      %p102 = por %p100, %p101
      %p103 = scmp.ne.s32.totalorder %s95, %s98
      %p104 = scmp.eq.s32.totalorder %s12, 0
      %p105 = por %p103, %p104
      %p106 = scmp.ne.s32.totalorder %s95, %s98
      %p107 = scmp.eq.s32.totalorder %s17, 3
      %p108 = por %p106, %p107
      %p109 = scmp.ne.s32.totalorder %s98, %s99
      %p110 = scmp.eq.s32.totalorder %s17, 0
      %p111 = por %p109, %p110
      %p112 = scmp.ne.s32.totalorder %s98, %s99
      %p113 = scmp.eq.s32.totalorder %s18, 3
      %p114 = por %p112, %p113
      %p116 = scmp.ne.s32.totalorder %s99, %s115
      %p117 = scmp.eq.s32.totalorder %s18, 0
      %p118 = por %p116, %p117
      %s119 = ssub.s32 %s19, %s38
      %s120 = ssub.s32 %s20, %s34
      %s121 = sor.u32 %s119, %s120
      %s122 = ssub.s32 %s21, %s30
      %s123 = sor.u32 %s121, %s122
      %p124 = scmp.eq.s32.totalorder %s123, 0
      %s126 = sadd.s32 %s125, 1
      %s127 = scalar_select %p124, %s125, %s126
      %p130 = pneg %p124
      %p131 = scmp.eq.s32.totalorder %s12, 3
      %p132 = por %p130, %p131
      %p133 = scmp.ne.s32.totalorder %s125, %s128
      %p134 = scmp.eq.s32.totalorder %s12, 0
      %p135 = por %p133, %p134
      %p136 = scmp.ne.s32.totalorder %s125, %s128
      %p137 = scmp.eq.s32.totalorder %s17, 3
      %p138 = por %p136, %p137
      %p139 = scmp.ne.s32.totalorder %s128, %s129
      %p140 = scmp.eq.s32.totalorder %s17, 0
      %p141 = por %p139, %p140
      %p142 = scmp.ne.s32.totalorder %s128, %s129
      %p143 = scmp.eq.s32.totalorder %s18, 3
      %p144 = por %p142, %p143
      %p146 = scmp.ne.s32.totalorder %s129, %s145
      %p147 = scmp.eq.s32.totalorder %s18, 0
      %p148 = por %p146, %p147
      %p149 = scmp.le.s32.totalorder 1, %s12
      %p150 = scmp.lt.s32.totalorder %s12, 5
      %p151 = pnand %p149, %p150
      %p152 = pneg %p151
      // Predicated region
      $region9: #{tpu_custom_call.1} parent=5 // pred_check
        _
      $region10: #{tpu_custom_call.1} parent=5 // pred_check_branch
        %154 = sbr.rel (%p151) target = $region12
      $region11: #{tpu_custom_call.1} parent=5 // pred_region
        %s155 = ssub.s32 %s12, 1
        // Predicated region
        $region13: #{tpu_custom_call.1} parent=11 // pred_check
          %p156 = pneg %p85
        $region14: #{tpu_custom_call.1} parent=11 // pred_check_branch
          %158 = sbr.rel (%p156) target = $region16
        $region15: #{tpu_custom_call.1} parent=11 // pred_region
          %s159 = smul.u32 3, %s23
          %p160 = scmp.lt.s32.totalorder %s159, 2
          %s161 = scalar_select %p160, %s159, 2
          %s162 = smul.addr %s161, 8
          %s163 = scalar_lea.vmem %s1, %s162
          %s164 = smul.u32 3, %s23
        $region16: #{tpu_custom_call.1} parent=11 // pred_fallthru
          _
        // Predicated region
        $region17: #{tpu_custom_call.1} parent=11 // pred_check
          %p165 = pneg %p111
        $region18: #{tpu_custom_call.1} parent=11 // pred_check_branch
          %167 = sbr.rel (%p165) target = $region20
        $region19: #{tpu_custom_call.1} parent=11 // pred_region
          %s168 = smul.u32 3, %s23
          %p169 = scmp.lt.s32.totalorder %s168, 2
          %s170 = scalar_select %p169, %s168, 2
          %s171 = smul.addr %s170, 8
          %s172 = scalar_lea.vmem %s2, %s171
          %s173 = smul.u32 3, %s23
        $region20: #{tpu_custom_call.1} parent=11 // pred_fallthru
          _
      $region12: #{tpu_custom_call.1} parent=5 // pred_fallthru
        _
      %p174 = scmp.lt.s32.totalorder %s12, 4
      // Predicated region
      $region21: #{tpu_custom_call.1} parent=5 // pred_check
        %p175 = pneg %p174
      $region22: #{tpu_custom_call.1} parent=5 // pred_check_branch
        %177 = sbr.rel (%p175) target = $region24
      $region23: #{tpu_custom_call.1} parent=5 // pred_region
        // Predicated region
        $region25: #{tpu_custom_call.1} parent=23 // pred_check
          %p178 = pneg %p53
        $region26: #{tpu_custom_call.1} parent=23 // pred_check_branch
          %180 = sbr.rel (%p178) target = $region28
        $region27: #{tpu_custom_call.1} parent=23 // pred_region
          %p181 = scmp.lt.s32.totalorder %s19, 1
          %s182 = scalar_select %p181, %s19, 1
          %p183 = scmp.lt.s32.totalorder %s21, 1
          %s184 = scalar_select %p183, %s21, 1
          %s185 = smul.addr %s182, 2
          %s186 = sadd.s32 %s184, %s185
          %s187 = smul.addr %s186, 4
          %s188 = scalar_lea.vmem %s0, %s187
        $region28: #{tpu_custom_call.1} parent=23 // pred_fallthru
          _
      $region24: #{tpu_custom_call.1} parent=5 // pred_fallthru
        _
      %p189 = scmp.le.s32.totalorder 1, %s12
      %p190 = scmp.lt.s32.totalorder %s12, 5
      %p191 = pnand %p189, %p190
      %p192 = pneg %p191
      // Predicated region
      $region29: #{tpu_custom_call.1} parent=5 // pred_check
        _
      $region30: #{tpu_custom_call.1} parent=5 // pred_check_branch
        %194 = sbr.rel (%p191) target = $region32
      $region31: #{tpu_custom_call.1} parent=5 // pred_region
        %s195 = ssub.s32 %s12, 1
        %p196 = scmp.lt.s32.totalorder %s22, 1
        %s197 = scalar_select %p196, %s22, 1
        %p198 = scmp.lt.s32.totalorder %s24, 1
        %s199 = scalar_select %p198, %s24, 1
        %s200 = smul.addr %s197, 2
        %s201 = sadd.s32 %s199, %s200
        %s202 = smul.addr %s201, 4
        %s203 = scalar_lea.vmem %s0, %s202
        %p204 = pneg %p59
        %p205 = pneg %p56
        %s206 = smul.u32 3, %s23
        %p207 = scmp.lt.s32.totalorder %s206, 2
        %s208 = scalar_select %p207, %s206, 2
        %s209 = smul.addr %s208, 8
        %s210 = scalar_lea.vmem %s1, %s209
        %p211 = pneg %p85
        %p212 = pneg %p82
        %s213 = smul.u32 3, %s23
        %p214 = scmp.lt.s32.totalorder %s213, 2
        %s215 = scalar_select %p214, %s213, 2
        %s216 = smul.addr %s215, 8
        %s217 = scalar_lea.vmem %s2, %s216
        %p218 = pneg %p111
        %p219 = pneg %p108
        %p220 = pneg %p141
        %p221 = pneg %p138
        %s222 = sand.u32 %s128, 1
        %s223 = scalar_lea.sflag [#allocation3], %s222
        %s224 = sand.u32 %s128, 1
        %s225 = smul.addr %s224, 24
        %s226 = scalar_lea.vmem [#allocation2], %s225
        %p227 = scmp.lt.s32.totalorder %s22, 1
        %s228 = scalar_select %p227, %s22, 1
        %p229 = scmp.lt.s32.totalorder %s24, 1
        %s230 = scalar_select %p229, %s24, 1
        %s231 = smul.addr %s228, 2
        %s232 = sadd.s32 %s230, %s231
        %s233 = smul.addr %s232, 4
        %s234 = scalar_lea.vmem %s0, %s233
        %s235 = smul.u32 3, %s23
        %p236 = scmp.lt.s32.totalorder %s235, 2
        %s237 = scalar_select %p236, %s235, 2
        %s238 = smul.addr %s237, 8
        %s239 = scalar_lea.vmem %s1, %s238
        %s240 = smul.u32 3, %s23
        %s241 = smul.u32 3, %s23
        %p242 = scmp.lt.s32.totalorder %s241, 2
        %s243 = scalar_select %p242, %s241, 2
        %s244 = smul.addr %s243, 8
        %s245 = scalar_lea.vmem %s2, %s244
        %s246 = smul.u32 3, %s23
        %s247 = smul.u32 3, %s23
        %v248 = vld [vmem:[%s239] sm:$0xff]
        %v249 = vld [vmem:[%s239 + $0x8] sm:$0xff]
        %v250 = vld [vmem:[%s239 + $0x10] sm:$0xff]
        %v251 = vld [vmem:[%s234] sm:$0xf]
        %v252 = vld [vmem:[%s245] sm:$0xff]
        %v253 = vld [vmem:[%s245 + $0x8] sm:$0xff]
        %v254 = vld [vmem:[%s245 + $0x10] sm:$0xff]
        %256 = vset.pattern.permute.xlu0 0
        %257 = vperm.xlu0 %256, %v252
        %v258 = vpop.permute.xlu0 %257
        %261 = vset.pattern.permute.xlu0 0
        %262 = vperm.xlu0 %261, %v253
        %v263 = vpop.permute.xlu0 %262
        %266 = vset.pattern.permute.xlu0 0
        %267 = vperm.xlu0 %266, %v254
        %v268 = vpop.permute.xlu0 %267
        %vm270 = vcmask 31744
        %v272 = vsel %vm270, %v248, 0
        %v275 = vsel %vm270, %v249, 0
        %v278 = vsel %vm270, %v250, 0
        %vm280 = vcmask 1043456
        %v282 = vsel %vm280, %v251, 0
        %284 = vmatprep.subr.mxu0 0.0
        %285 = vmatpush1.msra.mxu0 %v282
        %286 = vmatprep.subr.mxu0 0.0
        %287 = vmatpush1.msra.mxu0 0.0
        %288 = vmatprep.subr.mxu0 0.0
        %289 = vmatpush1.msra.mxu0 0.0
        %290 = vmatprep.subr.mxu0 0.0
        %291 = vmatpush1.msra.mxu0 0.0
        %292 = vmatprep.subr.mxu0 0.0
        %293 = vmatpush1.msra.mxu0 0.0
        %294 = vmatprep.subr.mxu0 0.0
        %295 = vmatpush1.msra.mxu0 0.0
        %296 = vmatprep.subr.mxu0 0.0
        %297 = vmatpush1.msra.mxu0 0.0
        %298 = vmatprep.subr.mxu0 0.0
        %299 = vmatpush1.msra.mxu0 0.0
        %300 = vmatprep.subr.mxu0 0.0
        %301 = vmatpush1.msra.mxu0 0.0
        %302 = vmatprep.subr.mxu0 0.0
        %303 = vmatpush1.msra.mxu0 0.0
        %304 = vmatprep.subr.mxu0 0.0
        %305 = vmatpush1.msra.mxu0 0.0
        %306 = vmatprep.subr.mxu0 0.0
        %307 = vmatpush1.msra.mxu0 0.0
        %308 = vmatprep.subr.mxu0 0.0
        %309 = vmatpush1.msra.mxu0 0.0
        %310 = vmatprep.subr.mxu0 0.0
        %311 = vmatpush1.msra.mxu0 0.0
        %312 = vmatprep.subr.mxu0 0.0
        %313 = vmatpush1.msra.mxu0 0.0
        %314 = vmatprep.subr.mxu0 0.0
        %315 = vmatpush1.msra.mxu0 0.0
        %316 = vmatprep.subr.mxu0 0.0
        %317 = vmatpush1.msra.mxu0 0.0
        %318 = vmatprep.subr.mxu0 0.0
        %319 = vmatpush1.msra.mxu0 0.0
        %320 = vmatprep.subr.mxu0 0.0
        %321 = vmatpush1.msra.mxu0 0.0
        %322 = vmatprep.subr.mxu0 0.0
        %323 = vmatpush1.msra.mxu0 0.0
        %324 = vmatprep.subr.mxu0 0.0
        %325 = vmatpush1.msra.mxu0 0.0
        %326 = vmatprep.subr.mxu0 0.0
        %327 = vmatpush1.msra.mxu0 0.0
        %328 = vmatprep.subr.mxu0 0.0
        %329 = vmatpush1.msra.mxu0 0.0
        %330 = vmatprep.subr.mxu0 0.0
        %331 = vmatpush1.msra.mxu0 0.0
        %332 = vmatprep.subr.mxu0 0.0
        %333 = vmatpush1.msra.mxu0 0.0
        %334 = vmatprep.subr.mxu0 0.0
        %335 = vmatpush1.msra.mxu0 0.0
        %336 = vmatprep.subr.mxu0 0.0
        %337 = vmatpush1.msra.mxu0 0.0
        %338 = vmatprep.subr.mxu0 0.0
        %339 = vmatpush1.msra.mxu0 0.0
        %340 = vmatprep.subr.mxu0 0.0
        %341 = vmatpush1.msra.mxu0 0.0
        %342 = vmatprep.subr.mxu0 0.0
        %343 = vmatpush1.msra.mxu0 0.0
        %344 = vmatprep.subr.mxu0 0.0
        %345 = vmatpush1.msra.mxu0 0.0
        %346 = vmatprep.subr.mxu0 0.0
        %347 = vmatpush1.msra.mxu0 0.0
        %348 = vmatprep.mubr.f32.mxu0 0.0
        %349 = vmatmul.mubr.f32.gmra.mrb[0].mxu0 %v272
        %v350 = vpop.f32.mrb[0].mxu0
        %v351 = vadd.f32 %v258, %v350
        %v352 = vpop.f32.mrb[0].mxu0
        %353 = vmatprep.mubr.f32.mxu0 0.0
        %354 = vmatmul.mubr.f32.gmra.mrb[0].mxu0 %v275
        %v355 = vpop.f32.mrb[0].mxu0
        %v356 = vadd.f32 %v263, %v355
        %v357 = vpop.f32.mrb[0].mxu0
        %358 = vmatprep.mubr.f32.mxu0 0.0
        %359 = vmatmul.mubr.f32.gmra.mrb[0].mxu0 %v278
        %v360 = vpop.f32.mrb[0].mxu0
        %v361 = vadd.f32 %v268, %v360
        %v362 = vpop.f32.mrb[0].mxu0
        %363 = vdwg.mxu0
        %364 = vst [vmem:[%s226] sm:$0xff] %v351
        %365 = vst [vmem:[%s226 + $0x8] sm:$0xff] %v356
        %366 = vst [vmem:[%s226 + $0x10] sm:$0xff] %v361
        %s367 = sand.u32 %s128, 1
        %s368 = scalar_lea.sflag [#allocation3], %s367
        %s369 = sand.u32 %s128, 1
        %s370 = smul.addr %s369, 24
        %s371 = scalar_lea.vmem [#allocation2], %s370
        // Predicated region
        $region33: #{tpu_custom_call.1} parent=31 // pred_check
          %p372 = pneg %p138
        $region34: #{tpu_custom_call.1} parent=31 // pred_check_branch
          %374 = sbr.rel (%p372) target = $region36
        $region35: #{tpu_custom_call.1} parent=31 // pred_region
          %s375 = smul.u32 3, %s23
          %s377 = ssub.s32 384, 384
          %378 = vsyncadd %s368, %s377
          %s379 = smul.addr %s375, 2
          %s380 = sadd.s32 %s24, %s379
          %s381 = smul.addr %s22, 6
          %s382 = sadd.s32 %s380, %s381
          %s383 = smul.addr %s382, 128
          %s384 = scalar_lea.hbm %s3, %s383
          %s385 = sshll.u32 %s371, 4
          %s386 = int_to_ptr.vmem [resolvable:$true] %s385
          %391 = dma.vmem_to_hbm [thread:$0]  %s386, 384, %s384, %s368, 128, 256, 8
        $region36: #{tpu_custom_call.1} parent=31 // pred_fallthru
          _
      $region32: #{tpu_custom_call.1} parent=5 // pred_fallthru
        _
      %p392 = scmp.le.s32.totalorder 2, %s12
      // Predicated region
      $region37: #{tpu_custom_call.1} parent=5 // pred_check
        %p393 = pneg %p392
      $region38: #{tpu_custom_call.1} parent=5 // pred_check_branch
        %395 = sbr.rel (%p393) target = $region40
      $region39: #{tpu_custom_call.1} parent=5 // pred_region
        %s396 = ssub.s32 %s12, 2
        // Predicated region
        $region41: #{tpu_custom_call.1} parent=39 // pred_check
          %p397 = pneg %p144
        $region42: #{tpu_custom_call.1} parent=39 // pred_check_branch
          %399 = sbr.rel (%p397) target = $region44
        $region43: #{tpu_custom_call.1} parent=39 // pred_region
          %s400 = sand.u32 %s129, 1
          %s401 = scalar_lea.sflag [#allocation3], %s400
          %s402 = sand.u32 %s129, 1
          %s403 = smul.addr %s402, 24
          %s404 = scalar_lea.vmem [#allocation2], %s403
          %405 = dma.done %s401, 384
        $region44: #{tpu_custom_call.1} parent=39 // pred_fallthru
          _
      $region40: #{tpu_custom_call.1} parent=5 // pred_fallthru
        _
    $region6: #{tpu_custom_call.1} parent=1 // loop_footer
      %s16 = sadd.s32 1, %s12
    $region7: #{tpu_custom_call.1} parent=1 // loop_footer_branch
      %11 = sbr.rel target = $region3
    $region8: #{tpu_custom_call.1} parent=1 // loop_exit
      _
    %406 = vsyncpa [#allocation3], 1
    %s407 = scalar_lea.sflag [#allocation3], 1
    %408 = vsyncpa %s407, 1

</llo_original>
